<compile_context>
chip_gen: v5e
topology: v5e:2x2
jax: 0.10.0
libtpu: 0.0.40
codegen_flags: <defaults>
</compile_context>

<pallas_src>
import jax
import jax.numpy as jnp
from jax.experimental import pallas as pl
from jax.experimental.pallas import tpu as pltpu


def _round_up(x, m):
    return ((x + m - 1) // m) * m


def _make_qknorm_kernel(use_groups):
    def kernel(q_ref, k_ref, sq_ref, sk_ref, *rest):
        if use_groups:
            m_ref, qo_ref, ko_ref = rest
        else:
            qo_ref, ko_ref = rest
            m_ref = None

        def norm(x_ref, s_ref, o_ref):
            x = x_ref[...].astype(jnp.float32)
            xx = x * x
            if use_groups:
                # Grouped mean over each packed sub-row's D lanes via one MXU
                # matmul with a block-diagonal (1/D) matrix; the result is the
                # per-sub-row mean already broadcast across that sub-row's
                # lanes (reduce + broadcast in a single otherwise-idle unit).
                ms = jnp.dot(xx, m_ref[...], preferred_element_type=jnp.float32)
            else:
                ms = jnp.mean(xx, axis=-1, keepdims=True)
            rrms = jax.lax.rsqrt(ms + 1e-6)
            # Match PyTorch RMSNorm exactly: (x * rrms).to(x_dtype) * scale,
            # then QKNorm casts to v.dtype.
            y = (x * rrms).astype(x_ref.dtype).astype(jnp.float32)
            o_ref[...] = (y * s_ref[...]).astype(o_ref.dtype)

        norm(q_ref, sq_ref, qo_ref)
        norm(k_ref, sk_ref, ko_ref)

    return kernel


def qknorm(q, k, v, query_scale, key_scale, *, tm=2048):
    """QKNorm.forward: (q, k, v) -> (q_normed, k_normed), both cast to v.dtype.

    q, k, v: [B, H, L, D]; query_scale / key_scale: [D] (RMSNorm scales).
    """
    B, H, L, D = q.shape
    N = B * H * L
    out_dtype = v.dtype

    # Lane-dense folding: pack 128 // D rows into the 128-lane minor dim.
    if D < 128 and 128 % D == 0:
        fold = 128 // D
    else:
        fold = 1
        # TODO(synk): D that is neither >=128 nor a divisor of 128 stays
        # lane-sparse (still correct, just not lane-dense).
    d_lane = fold * D
    use_groups = fold > 1

    nf = pl.cdiv(N, fold)                    # packed rows needed
    tm_eff = min(tm, _round_up(nf, 16))      # multiple of 16 (bf16 sublanes)
    grid_m = pl.cdiv(nf, tm_eff)
    nf_pad = grid_m * tm_eff
    n_pad = nf_pad * fold

    def prep(x):
        x2 = x.reshape(N, D)
        if n_pad != N:
            x2 = jnp.pad(x2, ((0, n_pad - N), (0, 0)))
        return x2.reshape(nf_pad, d_lane)

    q2 = prep(q)
    k2 = prep(k)

    def prep_scale(s):
        # Pre-cast to f32 in the wrapper; tile so packed lane j uses scale[j % D].
        s2 = s.astype(jnp.float32).reshape(1, D)
        return jnp.tile(s2, (1, fold))

    sq = prep_scale(query_scale)
    sk = prep_scale(key_scale)

    row_spec = pl.BlockSpec((tm_eff, d_lane), lambda i: (i, 0))
    scale_spec = pl.BlockSpec((1, d_lane), lambda i: (0, 0))

    inputs = [q2, k2, sq, sk]
    in_specs = [row_spec, row_spec, scale_spec, scale_spec]
    if use_groups:
        group = jnp.arange(d_lane, dtype=jnp.int32) // D
        m_mat = (group[:, None] == group[None, :]).astype(jnp.float32) / D
        inputs.append(m_mat)
        in_specs.append(pl.BlockSpec((d_lane, d_lane), lambda i: (0, 0)))

    out_shape = (
        jax.ShapeDtypeStruct((nf_pad, d_lane), out_dtype),
        jax.ShapeDtypeStruct((nf_pad, d_lane), out_dtype),
    )
    out_specs = [row_spec, row_spec]

    qn2, kn2 = pl.pallas_call(
        _make_qknorm_kernel(use_groups),
        out_shape=out_shape,
        grid_spec=pltpu.PrefetchScalarGridSpec(
            num_scalar_prefetch=0,
            grid=(grid_m,),
            in_specs=in_specs,
            out_specs=out_specs,
        ),
        compiler_params=pltpu.CompilerParams(
            dimension_semantics=("parallel",),
        ),
    )(*inputs)

    def unpack(y2):
        y = y2.reshape(n_pad, D)
        if n_pad != N:
            y = y[:N]
        return y.reshape(B, H, L, D)

    return unpack(qn2), unpack(kn2)


def _rmsnorm_ref(x, scale, out_dtype):
    xf = x.astype(jnp.float32)
    rrms = jax.lax.rsqrt(jnp.mean(xf * xf, axis=-1, keepdims=True) + 1e-6)
    y = (xf * rrms).astype(x.dtype).astype(jnp.float32) * scale.astype(jnp.float32)
    return y.astype(out_dtype)


def _check(B, H, L, D, key, dtype=jnp.bfloat16):
    k1, k2, k3, k4, k5 = jax.random.split(key, 5)
    q = jax.random.normal(k1, (B, H, L, D), dtype=dtype)
    k = jax.random.normal(k2, (B, H, L, D), dtype=dtype)
    v = jax.random.normal(k3, (B, H, L, D), dtype=dtype)
    query_scale = 1.0 + 0.1 * jax.random.normal(k4, (D,), dtype=jnp.float32)
    key_scale = 1.0 + 0.1 * jax.random.normal(k5, (D,), dtype=jnp.float32)

    qn, kn = qknorm(q, k, v, query_scale, key_scale)
    qn, kn = jax.block_until_ready((qn, kn))

    qn_ref = _rmsnorm_ref(q, query_scale, v.dtype)
    kn_ref = _rmsnorm_ref(k, key_scale, v.dtype)
    assert qn.shape == (B, H, L, D) and qn.dtype == v.dtype
    assert kn.shape == (B, H, L, D) and kn.dtype == v.dtype
    assert jnp.allclose(qn.astype(jnp.float32), qn_ref.astype(jnp.float32),
                        atol=1e-2, rtol=1e-2)
    assert jnp.allclose(kn.astype(jnp.float32), kn_ref.astype(jnp.float32),
                        atol=1e-2, rtol=1e-2)


if __name__ == "__main__":
    root = jax.random.PRNGKey(0)
    k_a, k_b, k_c = jax.random.split(root, 3)

    # D < 128 -> lane-dense folded path (4 rows packed per 128-lane row).
    _check(2, 4, 8, 32, k_a)
    # D = 128 (real FLUX head_dim) -> direct path, plain lane reduction.
    _check(2, 4, 8, 128, k_b)
    # N not divisible by fold*tile -> exercises the zero-pad + slice path.
    _check(2, 3, 7, 32, k_c)

    print("KERNEL_OK")
</pallas_src>

<mosaic_0001>
module attributes {stable_mosaic.version = 11 : i64} {
  func.func @kernel(%arg0: i32, %arg1: memref<16x128xbf16, #tpu.memory_space<vmem>>, %arg2: memref<16x128xbf16, #tpu.memory_space<vmem>>, %arg3: memref<1x128xf32, #tpu.memory_space<vmem>>, %arg4: memref<1x128xf32, #tpu.memory_space<vmem>>, %arg5: memref<128x128xf32, #tpu.memory_space<vmem>>, %arg6: memref<16x128xbf16, #tpu.memory_space<vmem>>, %arg7: memref<16x128xbf16, #tpu.memory_space<vmem>>) attributes {dimension_semantics = [#tpu.dimension_semantics<parallel>], iteration_bounds = array<i64: 1>, scalar_prefetch = 0 : i64, scratch_operands = 0 : i64, tpu.core_type = #tpu.core_type<tc>, window_params = [{transform_indices = @transform_0, window_bounds = array<i64: 16, 128>}, {transform_indices = @transform_1, window_bounds = array<i64: 16, 128>}, {pipeline_mode = #tpu.pipeline_mode<synchronous>, transform_indices = @transform_2, window_bounds = array<i64: 1, 128>}, {pipeline_mode = #tpu.pipeline_mode<synchronous>, transform_indices = @transform_3, window_bounds = array<i64: 1, 128>}, {pipeline_mode = #tpu.pipeline_mode<synchronous>, transform_indices = @transform_4, window_bounds = array<i64: 128, 128>}, {transform_indices = @transform_5, window_bounds = array<i64: 16, 128>}, {transform_indices = @transform_6, window_bounds = array<i64: 16, 128>}]} {
    %c0 = arith.constant 0 : index
    %c0_0 = arith.constant 0 : index
    %0 = vector.load %arg1[%c0, %c0_0] : memref<16x128xbf16, #tpu.memory_space<vmem>>, vector<16x128xbf16>
    %1 = arith.extf %0 : vector<16x128xbf16> to vector<16x128xf32>
    %2 = arith.mulf %1, %1 : vector<16x128xf32>
    %c0_1 = arith.constant 0 : index
    %c0_2 = arith.constant 0 : index
    %3 = vector.load %arg5[%c0_1, %c0_2] : memref<128x128xf32, #tpu.memory_space<vmem>>, vector<128x128xf32>
    %cst = arith.constant dense<0.000000e+00> : vector<16x128xf32>
    %4 = tpu.matmul %2, %3, %cst {dimension_numbers = #tpu.dot_dimension_numbers<[1], [0], [0], [1], [0, 0, 1, 1], [], []>} : vector<16x128xf32>, vector<128x128xf32>, vector<16x128xf32> -> vector<16x128xf32>
    %cst_3 = arith.constant 9.99999997E-7 : f32
    %5 = vector.broadcast %cst_3 : f32 to vector<16x128xf32>
    %6 = arith.addf %4, %5 : vector<16x128xf32>
    %7 = math.rsqrt %6 : vector<16x128xf32>
    %8 = arith.mulf %1, %7 : vector<16x128xf32>
    %9 = arith.truncf %8 : vector<16x128xf32> to vector<16x128xbf16>
    %10 = arith.extf %9 : vector<16x128xbf16> to vector<16x128xf32>
    %c0_4 = arith.constant 0 : index
    %c0_5 = arith.constant 0 : index
    %11 = vector.load %arg3[%c0_4, %c0_5] : memref<1x128xf32, #tpu.memory_space<vmem>>, vector<1x128xf32>
    %12 = vector.broadcast %11 : vector<1x128xf32> to vector<16x128xf32>
    %13 = arith.mulf %10, %12 : vector<16x128xf32>
    %14 = arith.truncf %13 : vector<16x128xf32> to vector<16x128xbf16>
    %c0_6 = arith.constant 0 : index
    %c0_7 = arith.constant 0 : index
    %15 = vector.load %arg6[%c0_6, %c0_7] : memref<16x128xbf16, #tpu.memory_space<vmem>>, vector<16x128xbf16>
    tpu.vector_store %arg6[%c0_6, %c0_7], %14 {strides = array<i32>} : memref<16x128xbf16, #tpu.memory_space<vmem>>, vector<16x128xbf16>,
    %c0_8 = arith.constant 0 : index
    %c0_9 = arith.constant 0 : index
    %16 = vector.load %arg2[%c0_8, %c0_9] : memref<16x128xbf16, #tpu.memory_space<vmem>>, vector<16x128xbf16>
    %17 = arith.extf %16 : vector<16x128xbf16> to vector<16x128xf32>
    %18 = arith.mulf %17, %17 : vector<16x128xf32>
    %c0_10 = arith.constant 0 : index
    %c0_11 = arith.constant 0 : index
    %19 = vector.load %arg5[%c0_10, %c0_11] : memref<128x128xf32, #tpu.memory_space<vmem>>, vector<128x128xf32>
    %cst_12 = arith.constant dense<0.000000e+00> : vector<16x128xf32>
    %20 = tpu.matmul %18, %19, %cst_12 {dimension_numbers = #tpu.dot_dimension_numbers<[1], [0], [0], [1], [0, 0, 1, 1], [], []>} : vector<16x128xf32>, vector<128x128xf32>, vector<16x128xf32> -> vector<16x128xf32>
    %cst_13 = arith.constant 9.99999997E-7 : f32
    %21 = vector.broadcast %cst_13 : f32 to vector<16x128xf32>
    %22 = arith.addf %20, %21 : vector<16x128xf32>
    %23 = math.rsqrt %22 : vector<16x128xf32>
    %24 = arith.mulf %17, %23 : vector<16x128xf32>
    %25 = arith.truncf %24 : vector<16x128xf32> to vector<16x128xbf16>
    %26 = arith.extf %25 : vector<16x128xbf16> to vector<16x128xf32>
    %c0_14 = arith.constant 0 : index
    %c0_15 = arith.constant 0 : index
    %27 = vector.load %arg4[%c0_14, %c0_15] : memref<1x128xf32, #tpu.memory_space<vmem>>, vector<1x128xf32>
    %28 = vector.broadcast %27 : vector<1x128xf32> to vector<16x128xf32>
    %29 = arith.mulf %26, %28 : vector<16x128xf32>
    %30 = arith.truncf %29 : vector<16x128xf32> to vector<16x128xbf16>
    %c0_16 = arith.constant 0 : index
    %c0_17 = arith.constant 0 : index
    %31 = vector.load %arg7[%c0_16, %c0_17] : memref<16x128xbf16, #tpu.memory_space<vmem>>, vector<16x128xbf16>
    tpu.vector_store %arg7[%c0_16, %c0_17], %30 {strides = array<i32>} : memref<16x128xbf16, #tpu.memory_space<vmem>>, vector<16x128xbf16>,
    return
  }
  func.func @transform_0(%arg0: i32) -> (i32, i32) {
    %c0_i32 = arith.constant 0 : i32
    %c0_i32_0 = arith.constant 0 : i32
    return %arg0, %c0_i32 : i32, i32
  }
  func.func @transform_1(%arg0: i32) -> (i32, i32) {
    %c0_i32 = arith.constant 0 : i32
    %c0_i32_0 = arith.constant 0 : i32
    return %arg0, %c0_i32 : i32, i32
  }
  func.func @transform_2(%arg0: i32) -> (i32, i32) {
    %c0_i32 = arith.constant 0 : i32
    %c0_i32_0 = arith.constant 0 : i32
    %c0_i32_1 = arith.constant 0 : i32
    return %c0_i32, %c0_i32_0 : i32, i32
  }
  func.func @transform_3(%arg0: i32) -> (i32, i32) {
    %c0_i32 = arith.constant 0 : i32
    %c0_i32_0 = arith.constant 0 : i32
    %c0_i32_1 = arith.constant 0 : i32
    return %c0_i32, %c0_i32_0 : i32, i32
  }
  func.func @transform_4(%arg0: i32) -> (i32, i32) {
    %c0_i32 = arith.constant 0 : i32
    %c0_i32_0 = arith.constant 0 : i32
    %c0_i32_1 = arith.constant 0 : i32
    return %c0_i32, %c0_i32_0 : i32, i32
  }
  func.func @transform_5(%arg0: i32) -> (i32, i32) {
    %c0_i32 = arith.constant 0 : i32
    %c0_i32_0 = arith.constant 0 : i32
    return %arg0, %c0_i32 : i32, i32
  }
  func.func @transform_6(%arg0: i32) -> (i32, i32) {
    %c0_i32 = arith.constant 0 : i32
    %c0_i32_0 = arith.constant 0 : i32
    return %arg0, %c0_i32 : i32, i32
  }
}

</mosaic_0001>

<llo_original>
// kernel: tpu_custom_call.1
$region0: #{tpu_custom_call.1}
  #allocation0 [shape = 'u32[]', space=smem, size = 0x4, offset = 0x4, fixed_abs, tag = 'smem constant byte address 0x4 - core index']
  #allocation1 [shape = 'u32[72,128]{1,0:T(1,128)}', space=vmem, size = 0x9000, scoped, tag = 'internal scratch']
  %s0 = inlined_call_operand.hbm [shape: bf16[16,128], index: 0, kind: input, shape index: {}]
  %s1 = inlined_call_operand.hbm [shape: bf16[16,128], index: 1, kind: input, shape index: {}]
  %s2 = inlined_call_operand.vmem [shape: f32[1,128], index: 2, kind: input, shape index: {}]
  %s3 = inlined_call_operand.vmem [shape: f32[1,128], index: 3, kind: input, shape index: {}]
  %s4 = inlined_call_operand.hbm [shape: f32[128,128], index: 4, kind: input, shape index: {}]
  %s5 = inlined_call_operand.hbm [shape: bf16[16,128], index: 5, kind: output, shape index: {0}]
  %s6 = inlined_call_operand.hbm [shape: bf16[16,128], index: 6, kind: output, shape index: {1}]
  %7 = xla_tuple %s5, %s6
  %s8 = sld [smem:[#allocation0]]
  $region50: #{tpu_custom_call.1} parent=0
    _
  %s10 = ssub.s32 1, %s8
  %s11 = scalar_select 0, %s10, %s8
  $region1: #{tpu_custom_call.1} parent=0
    #allocation2 [shape = 'u8[4096]{0}', space=vmem, size = 0x1000, scoped, tag = 'input window, operand 0, single buffered']
    #allocation3 [shape = 's32[1]{0}', space=sflag, size = 0x4, scoped, tag = 'scoped memory for tpu_custom_call.1']
    #allocation4 [shape = 's32[1]{0}', space=sflag, size = 0x4, scoped, tag = 'scoped memory for tpu_custom_call.1']
    #allocation5 [shape = 'u8[4096]{0}', space=vmem, size = 0x1000, scoped, tag = 'input window, operand 1, single buffered']
    #allocation6 [shape = 's32[1]{0}', space=sflag, size = 0x4, scoped, tag = 'scoped memory for tpu_custom_call.1']
    #allocation7 [shape = 'u8[65536]{0}', space=vmem, size = 0x10000, scoped, tag = 'input window, operand 4, single buffered']
    #allocation8 [shape = 'u8[4096]{0}', space=vmem, size = 0x1000, scoped, tag = 'output window, operand 0, single buffered']
    #allocation9 [shape = 'u8[4096]{0}', space=vmem, size = 0x1000, scoped, tag = 'output window, operand 1, single buffered']
    #allocation10 [shape = 's32[1]{0}', space=sflag, size = 0x4, scoped, tag = 'scoped memory for tpu_custom_call.1']
    %12 = vsyncpa [#allocation3], 0
    %13 = vsyncpa [#allocation6], 0
    %14 = vsyncpa [#allocation4], 0
    %15 = vsyncpa [#allocation10], 0
    // Predicated region
    $region2: #{tpu_custom_call.1} parent=1 // pred_check
      _
    $region3: #{tpu_custom_call.1} parent=1 // pred_check_branch
      %17 = sbr.rel (0) target = $region5
    $region4: #{tpu_custom_call.1} parent=1 // pred_region
      %19 = vsyncadd [#allocation3], 0
      %s20 = sshll.u32 %s0, 4
      %s21 = int_to_ptr.hbm [resolvable:$true] %s20
      %s22 = sshll.u32 [#allocation2], 4
      %s23 = int_to_ptr.vmem [resolvable:$true] %s22
      %28 = dma.hbm_to_vmem [thread:$0]  %s21, 128, %s23, [#allocation3], 64, 64, 4
    $region5: #{tpu_custom_call.1} parent=1 // pred_fallthru
      _
    // Predicated region
    $region6: #{tpu_custom_call.1} parent=1 // pred_check
      _
    $region7: #{tpu_custom_call.1} parent=1 // pred_check_branch
      %30 = sbr.rel (0) target = $region9
    $region8: #{tpu_custom_call.1} parent=1 // pred_region
      %32 = vsyncadd [#allocation6], 0
      %s33 = sshll.u32 %s1, 4
      %s34 = int_to_ptr.hbm [resolvable:$true] %s33
      %s35 = sshll.u32 [#allocation5], 4
      %s36 = int_to_ptr.vmem [resolvable:$true] %s35
      %41 = dma.hbm_to_vmem [thread:$0]  %s34, 128, %s36, [#allocation6], 64, 64, 4
    $region9: #{tpu_custom_call.1} parent=1 // pred_fallthru
      _
    // Predicated region
    $region10: #{tpu_custom_call.1} parent=1 // pred_check
      _
    $region11: #{tpu_custom_call.1} parent=1 // pred_check_branch
      %43 = sbr.rel (0) target = $region13
    $region12: #{tpu_custom_call.1} parent=1 // pred_region
      _
    $region13: #{tpu_custom_call.1} parent=1 // pred_fallthru
      _
    // Predicated region
    $region14: #{tpu_custom_call.1} parent=1 // pred_check
      _
    $region15: #{tpu_custom_call.1} parent=1 // pred_check_branch
      %45 = sbr.rel (0) target = $region17
    $region16: #{tpu_custom_call.1} parent=1 // pred_region
      _
    $region17: #{tpu_custom_call.1} parent=1 // pred_fallthru
      _
    // Predicated region
    $region18: #{tpu_custom_call.1} parent=1 // pred_check
      _
    $region19: #{tpu_custom_call.1} parent=1 // pred_check_branch
      %47 = sbr.rel (0) target = $region21
    $region20: #{tpu_custom_call.1} parent=1 // pred_region
      %49 = vsyncadd [#allocation6], 0
      %s50 = sshll.u32 %s4, 4
      %s51 = int_to_ptr.hbm [resolvable:$true] %s50
      %s52 = sshll.u32 [#allocation7], 4
      %s53 = int_to_ptr.vmem [resolvable:$true] %s52
      %58 = dma.hbm_to_vmem [thread:$0]  %s51, 2048, %s53, [#allocation6], 128, 128, 8
    $region21: #{tpu_custom_call.1} parent=1 // pred_fallthru
      _
    // Predicated region
    $region22: #{tpu_custom_call.1} parent=1 // pred_check
      _
    $region23: #{tpu_custom_call.1} parent=1 // pred_check_branch
      %60 = sbr.rel (0) target = $region25
    $region24: #{tpu_custom_call.1} parent=1 // pred_region
      %62 = dma.done [#allocation3], 128
    $region25: #{tpu_custom_call.1} parent=1 // pred_fallthru
      _
    // Predicated region
    $region26: #{tpu_custom_call.1} parent=1 // pred_check
      _
    $region27: #{tpu_custom_call.1} parent=1 // pred_check_branch
      %64 = sbr.rel (0) target = $region29
    $region28: #{tpu_custom_call.1} parent=1 // pred_region
      %66 = dma.done [#allocation6], 128
    $region29: #{tpu_custom_call.1} parent=1 // pred_fallthru
      _
    // Predicated region
    $region30: #{tpu_custom_call.1} parent=1 // pred_check
      _
    $region31: #{tpu_custom_call.1} parent=1 // pred_check_branch
      %68 = sbr.rel (0) target = $region33
    $region32: #{tpu_custom_call.1} parent=1 // pred_region
      %70 = dma.done [#allocation6], 2048
    $region33: #{tpu_custom_call.1} parent=1 // pred_fallthru
      _
    %v71 = vld [vmem:[#allocation2] sm:$0xf]
    %v72 = vld [vmem:[#allocation2 + $0x4] sm:$0xf]
    %v73 = vunpack.c.l.bf16 %v71
    %v74 = vunpack.c.l.bf16 %v72
    %v75 = vmul.f32 %v73, %v73
    %v76 = vmul.f32 %v74, %v74
    %v77 = vld [vmem:[#allocation7] sm:$0xff]
    %v78 = vld [vmem:[#allocation7 + $0x8] sm:$0xff]
    %v79 = vld [vmem:[#allocation7 + $0x10] sm:$0xff]
    %v80 = vld [vmem:[#allocation7 + $0x18] sm:$0xff]
    %v81 = vld [vmem:[#allocation7 + $0x20] sm:$0xff]
    %v82 = vld [vmem:[#allocation7 + $0x28] sm:$0xff]
    %v83 = vld [vmem:[#allocation7 + $0x30] sm:$0xff]
    %v84 = vld [vmem:[#allocation7 + $0x38] sm:$0xff]
    %v85 = vld [vmem:[#allocation7 + $0x40] sm:$0xff]
    %v86 = vld [vmem:[#allocation7 + $0x48] sm:$0xff]
    %v87 = vld [vmem:[#allocation7 + $0x50] sm:$0xff]
    %v88 = vld [vmem:[#allocation7 + $0x58] sm:$0xff]
    %v89 = vld [vmem:[#allocation7 + $0x60] sm:$0xff]
    %v90 = vld [vmem:[#allocation7 + $0x68] sm:$0xff]
    %v91 = vld [vmem:[#allocation7 + $0x70] sm:$0xff]
    %v92 = vld [vmem:[#allocation7 + $0x78] sm:$0xff]
    %93 = vmatpush.msra.mxu0 %v92
    %94 = vmatpush.msra.mxu0 %v91
    %95 = vmatpush.msra.mxu0 %v90
    %96 = vmatpush.msra.mxu0 %v89
    %97 = vmatpush.msra.mxu0 %v88
    %98 = vmatpush.msra.mxu0 %v87
    %99 = vmatpush.msra.mxu0 %v86
    %100 = vmatpush.msra.mxu0 %v85
    %101 = vmatpush.msra.mxu0 %v84
    %102 = vmatpush.msra.mxu0 %v83
    %103 = vmatpush.msra.mxu0 %v82
    %104 = vmatpush.msra.mxu0 %v81
    %105 = vmatpush.msra.mxu0 %v80
    %106 = vmatpush.msra.mxu0 %v79
    %107 = vmatpush.msra.mxu0 %v78
    %108 = vmatpush.msra.mxu0 %v77
    %109 = vmatmul.f32.gmra.mxu0 %v75
    %v110 = vpop.f32.mrf.mxu0
    %v111 = vadd.f32 1e-06, %v110
    %112 = vmatmul.f32.gmra.mxu0 %v76
    %v113 = vpop.f32.mrf.mxu0
    %v114 = vadd.f32 1e-06, %v113
    %115 = vdwg.mxu0
    %v116 = vrsqrt.pop %v111
    %v117 = vmul.f32 %v116, %v111
    %v118 = vmul.f32 %v117, %v116
    %v119 = vmul.f32 0.5, %v118
    %v120 = vsub.f32 1.5, %v119
    %v121 = vmul.f32 %v116, %v120
    %vm122 = vweird.f32 %v111
    %vm123 = vweird.f32 %v116
    %vm124 = vmor %vm122, %vm123
    %v125 = vsel %vm124, %v116, %v121
    %v126 = vrsqrt.pop %v114
    %v127 = vmul.f32 %v126, %v114
    %v128 = vmul.f32 %v127, %v126
    %v129 = vmul.f32 0.5, %v128
    %v130 = vsub.f32 1.5, %v129
    %v131 = vmul.f32 %v126, %v130
    %vm132 = vweird.f32 %v114
    %vm133 = vweird.f32 %v126
    %vm134 = vmor %vm132, %vm133
    %v135 = vsel %vm134, %v126, %v131
    %v136 = vmul.f32 %v73, %v125
    %v137 = vmul.f32 %v74, %v135
    %v138 = vpack.c.bf16 %v136, %v136
    %v139 = vpack.c.bf16 %v137, %v137
    %v140 = vunpack.c.l.bf16 %v138
    %v141 = vunpack.c.l.bf16 %v139
    %v142 = vld [vmem:[%s2] sm:$0x1]
    %v144 = vperm.slane %v142, 0
    %v146 = vmul.f32 %v140, %v144
    %v147 = vmul.f32 %v141, %v144
    %v148 = vpack.c.bf16 %v146, %v146
    %v149 = vpack.c.bf16 %v147, %v147
    %150 = vst [vmem:[#allocation8] sm:$0xf] %v148
    %151 = vst [vmem:[#allocation8 + $0x4] sm:$0xf] %v149
    %v152 = vld [vmem:[#allocation5] sm:$0xf]
    %v153 = vld [vmem:[#allocation5 + $0x4] sm:$0xf]
    %v154 = vunpack.c.l.bf16 %v152
    %v155 = vunpack.c.l.bf16 %v153
    %v156 = vmul.f32 %v154, %v154
    %v157 = vmul.f32 %v155, %v155
    %v158 = vld [vmem:[#allocation7] sm:$0xff]
    %v159 = vld [vmem:[#allocation7 + $0x8] sm:$0xff]
    %v160 = vld [vmem:[#allocation7 + $0x10] sm:$0xff]
    %v161 = vld [vmem:[#allocation7 + $0x18] sm:$0xff]
    %v162 = vld [vmem:[#allocation7 + $0x20] sm:$0xff]
    %v163 = vld [vmem:[#allocation7 + $0x28] sm:$0xff]
    %v164 = vld [vmem:[#allocation7 + $0x30] sm:$0xff]
    %v165 = vld [vmem:[#allocation7 + $0x38] sm:$0xff]
    %v166 = vld [vmem:[#allocation7 + $0x40] sm:$0xff]
    %v167 = vld [vmem:[#allocation7 + $0x48] sm:$0xff]
    %v168 = vld [vmem:[#allocation7 + $0x50] sm:$0xff]
    %v169 = vld [vmem:[#allocation7 + $0x58] sm:$0xff]
    %v170 = vld [vmem:[#allocation7 + $0x60] sm:$0xff]
    %v171 = vld [vmem:[#allocation7 + $0x68] sm:$0xff]
    %v172 = vld [vmem:[#allocation7 + $0x70] sm:$0xff]
    %v173 = vld [vmem:[#allocation7 + $0x78] sm:$0xff]
    %174 = vmatpush.msra.mxu0 %v173
    %175 = vmatpush.msra.mxu0 %v172
    %176 = vmatpush.msra.mxu0 %v171
    %177 = vmatpush.msra.mxu0 %v170
    %178 = vmatpush.msra.mxu0 %v169
    %179 = vmatpush.msra.mxu0 %v168
    %180 = vmatpush.msra.mxu0 %v167
    %181 = vmatpush.msra.mxu0 %v166
    %182 = vmatpush.msra.mxu0 %v165
    %183 = vmatpush.msra.mxu0 %v164
    %184 = vmatpush.msra.mxu0 %v163
    %185 = vmatpush.msra.mxu0 %v162
    %186 = vmatpush.msra.mxu0 %v161
    %187 = vmatpush.msra.mxu0 %v160
    %188 = vmatpush.msra.mxu0 %v159
    %189 = vmatpush.msra.mxu0 %v158
    %190 = vmatmul.f32.gmra.mxu0 %v156
    %v191 = vpop.f32.mrf.mxu0
    %v192 = vadd.f32 1e-06, %v191
    %193 = vmatmul.f32.gmra.mxu0 %v157
    %v194 = vpop.f32.mrf.mxu0
    %v195 = vadd.f32 1e-06, %v194
    %196 = vdwg.mxu0
    %v197 = vrsqrt.pop %v192
    %v198 = vmul.f32 %v197, %v192
    %v199 = vmul.f32 %v198, %v197
    %v200 = vmul.f32 0.5, %v199
    %v201 = vsub.f32 1.5, %v200
    %v202 = vmul.f32 %v197, %v201
    %vm203 = vweird.f32 %v192
    %vm204 = vweird.f32 %v197
    %vm205 = vmor %vm203, %vm204
    %v206 = vsel %vm205, %v197, %v202
    %v207 = vrsqrt.pop %v195
    %v208 = vmul.f32 %v207, %v195
    %v209 = vmul.f32 %v208, %v207
    %v210 = vmul.f32 0.5, %v209
    %v211 = vsub.f32 1.5, %v210
    %v212 = vmul.f32 %v207, %v211
    %vm213 = vweird.f32 %v195
    %vm214 = vweird.f32 %v207
    %vm215 = vmor %vm213, %vm214
    %v216 = vsel %vm215, %v207, %v212
    %v217 = vmul.f32 %v154, %v206
    %v218 = vmul.f32 %v155, %v216
    %v219 = vpack.c.bf16 %v217, %v217
    %v220 = vpack.c.bf16 %v218, %v218
    %v221 = vunpack.c.l.bf16 %v219
    %v222 = vunpack.c.l.bf16 %v220
    %v223 = vld [vmem:[%s3] sm:$0x1]
    %v225 = vperm.slane %v223, 0
    %v227 = vmul.f32 %v221, %v225
    %v228 = vmul.f32 %v222, %v225
    %v229 = vpack.c.bf16 %v227, %v227
    %v230 = vpack.c.bf16 %v228, %v228
    %231 = vst [vmem:[#allocation9] sm:$0xf] %v229
    %232 = vst [vmem:[#allocation9 + $0x4] sm:$0xf] %v230
    // Predicated region
    $region34: #{tpu_custom_call.1} parent=1 // pred_check
      _
    $region35: #{tpu_custom_call.1} parent=1 // pred_check_branch
      %234 = sbr.rel (0) target = $region37
    $region36: #{tpu_custom_call.1} parent=1 // pred_region
      %236 = vsyncadd [#allocation4], 0
      %s237 = sshll.u32 [#allocation8], 4
      %s238 = int_to_ptr.vmem [resolvable:$true] %s237
      %s239 = sshll.u32 %s5, 4
      %s240 = int_to_ptr.hbm [resolvable:$true] %s239
      %245 = dma.vmem_to_hbm [thread:$0]  %s238, 128, %s240, [#allocation4], 64, 64, 4
    $region37: #{tpu_custom_call.1} parent=1 // pred_fallthru
      _
    // Predicated region
    $region38: #{tpu_custom_call.1} parent=1 // pred_check
      _
    $region39: #{tpu_custom_call.1} parent=1 // pred_check_branch
      %247 = sbr.rel (0) target = $region41
    $region40: #{tpu_custom_call.1} parent=1 // pred_region
      %249 = vsyncadd [#allocation10], 0
      %s250 = sshll.u32 [#allocation9], 4
      %s251 = int_to_ptr.vmem [resolvable:$true] %s250
      %s252 = sshll.u32 %s6, 4
      %s253 = int_to_ptr.hbm [resolvable:$true] %s252
      %258 = dma.vmem_to_hbm [thread:$0]  %s251, 128, %s253, [#allocation10], 64, 64, 4
    $region41: #{tpu_custom_call.1} parent=1 // pred_fallthru
      _
    // Predicated region
    $region42: #{tpu_custom_call.1} parent=1 // pred_check
      _
    $region43: #{tpu_custom_call.1} parent=1 // pred_check_branch
      %260 = sbr.rel (0) target = $region45
    $region44: #{tpu_custom_call.1} parent=1 // pred_region
      %262 = dma.done [#allocation4], 128
    $region45: #{tpu_custom_call.1} parent=1 // pred_fallthru
      _
    // Predicated region
    $region46: #{tpu_custom_call.1} parent=1 // pred_check
      _
    $region47: #{tpu_custom_call.1} parent=1 // pred_check_branch
      %264 = sbr.rel (0) target = $region49
    $region48: #{tpu_custom_call.1} parent=1 // pred_region
      %266 = dma.done [#allocation10], 128
    $region49: #{tpu_custom_call.1} parent=1 // pred_fallthru
      _
    %267 = vsyncpa [#allocation3], 1
    %268 = vsyncpa [#allocation6], 1
    %269 = vsyncpa [#allocation4], 1
    %270 = vsyncpa [#allocation10], 1

</llo_original>
